<compile_context>
chip_gen: v7x
topology: tpu7x:2x2x1
jax: 0.10.0
libtpu: 0.0.40
codegen_flags: <defaults>
</compile_context>

<pallas_src>
import jax
import jax.numpy as jnp
from jax.experimental import pallas as pl
from jax.experimental.pallas import tpu as pltpu

# Offsets inside the packed flat (66,) f32 parameter array.
# PyTorch nn.Linear weight layout is (out, in), row-major => W[j,k] at j*in+k.
_W1, _B1, _W2, _B2, _W3, _B3 = 0, 25, 30, 55, 60, 65
_N_PARAMS = 66
_F = 5                      # feature width
_LANES = 128
_SUBLANES = 8
_MIN_BLOCK = _LANES * _SUBLANES   # 1024: keeps (S,128) blocks (8,128)-aligned


def _round_up(v, m):
    return m * pl.cdiv(v, m)


def _linear_rows(rows, p_ref, w_off, b_off, n_out, n_in):
    """y[j] = sum_k W[j,k] * x[k] + b[j] as unrolled VPU broadcast-FMAs.

    `rows` is a list of (S, 128) dense arrays; W/b are scalars read from SMEM.
    """
    outs = []
    for j in range(n_out):
        acc = rows[0] * p_ref[w_off + j * n_in]
        for k in range(1, n_in):
            acc = acc + rows[k] * p_ref[w_off + j * n_in + k]
        outs.append(acc + p_ref[b_off + j])
    return outs


def _softmax_unnormalized(rows):
    """Stable softmax numerators + refined reciprocal of the denominator."""
    m = rows[0]
    for r in rows[1:]:
        m = jnp.maximum(m, r)
    es = [jnp.exp(r - m) for r in rows]          # EUP
    s = es[0]
    for e in es[1:]:
        s = s + e
    inv = pl.reciprocal(s, approx=True)          # EUP approximate recip
    inv = inv * (2.0 - s * inv)                  # one Newton step (keep!)
    return es, inv


def mlp_kernel(p_ref, x_ref, o_ref):
    # p_ref: (66,)        f32 SMEM  -- packed W1,b1,W2,b2,W3,b3 (resident).
    # x_ref: (5, S, 128)  f32 VMEM  -- features on axis 0, batch dense (S,128).
    # o_ref: (S, 128)     f32 VMEM  -- sublane+lane dense output tile.
    xs = [x_ref[k] for k in range(_F)]                       # 5 x (S, 128)

    # Layer 1: Linear(5,5) + softmax (fully normalized).
    e1, inv1 = _softmax_unnormalized(
        _linear_rows(xs, p_ref, _W1, _B1, _F, _F))
    h1 = [e * inv1 for e in e1]

    # Layer 2: Linear(5,5) + softmax, with the normalization folded into the
    # final Linear(5,1):  out = (sum_j W3[j] * e_j) * inv + b3.
    e2, inv2 = _softmax_unnormalized(
        _linear_rows(h1, p_ref, _W2, _B2, _F, _F))
    acc = e2[0] * p_ref[_W3 + 0]
    for k in range(1, _F):
        acc = acc + e2[k] * p_ref[_W3 + k]
    o_ref[...] = acc * inv2 + p_ref[_B3]


def mlp_forward(x, params, block_b=65536):
    """x: (B, 5) float32 -> (B, 1) float32."""
    (w1, b1), (w2, b2), (w3, b3) = params
    B = x.shape[0]

    # Pack all six parameter tensors into one flat f32 array (one SMEM operand).
    packed = jnp.concatenate([
        w1.reshape(-1), b1.reshape(-1),
        w2.reshape(-1), b2.reshape(-1),
        w3.reshape(-1), b3.reshape(-1),
    ]).astype(jnp.float32)
    assert packed.shape[0] == _N_PARAMS

    # Block size: multiple of 8*128 so every block/intermediate is a full
    # (8,128)-tiled vreg array; cap it so large batches get >= 2 grid steps
    # (shards the "parallel" batch axis across v7x's two TensorCores).
    block_b = _round_up(max(int(block_b), _MIN_BLOCK), _MIN_BLOCK)
    half = _round_up(pl.cdiv(B, 2), _MIN_BLOCK)
    block_b = min(block_b, max(half, _MIN_BLOCK))
    b_pad = _round_up(B, block_b)
    s_blk = block_b // _LANES                    # multiple of 8

    # Dense layout: X^T reshaped to (5, b_pad//128, 128) so the batch fills
    # the whole (sublane, lane) plane of every vreg.  allow_input_fusion lets
    # XLA fuse this pad/transpose/reshape into the pallas_call operand rather
    # than materializing a second HBM copy of X.
    xt = jnp.pad(x.astype(jnp.float32).T, ((0, 0), (0, b_pad - B)))
    xt = xt.reshape(_F, b_pad // _LANES, _LANES)

    grid = (b_pad // block_b,)

    cost = pl.CostEstimate(
        flops=145 * b_pad,            # three tiny linears + two softmaxes / elem
        transcendentals=12 * b_pad,   # 10 exp + 2 approx reciprocals / elem
        bytes_accessed=24 * b_pad + 4 * _N_PARAMS,
    )

    out = pl.pallas_call(
        mlp_kernel,
        out_shape=jax.ShapeDtypeStruct((b_pad // _LANES, _LANES), jnp.float32),
        grid=grid,
        in_specs=[
            pl.BlockSpec(memory_space=pltpu.MemorySpace.SMEM),     # packed params
            pl.BlockSpec((_F, s_blk, _LANES), lambda i: (0, i, 0)),  # X^T tile
        ],
        out_specs=pl.BlockSpec((s_blk, _LANES), lambda i: (i, 0)),
        compiler_params=pltpu.CompilerParams(
            dimension_semantics=("parallel",),
            allow_input_fusion=[False, True],   # fuse pad/transpose of x only
            vmem_limit_bytes=32 << 20,
        ),
        cost_estimate=cost,
    )(packed, xt)

    return out.reshape(-1)[:B].reshape(B, 1)


def init_params(key):
    """Deterministic parameter init matching the module's shapes:
       Linear(5,5), Linear(5,5), Linear(5,1) with W of shape (out, in)."""
    shapes = [((5, 5), (5,)), ((5, 5), (5,)), ((1, 5), (1,))]
    params = []
    for (ws, bs) in shapes:
        key, kw, kb = jax.random.split(key, 3)
        w = jax.random.normal(kw, ws, jnp.float32) * 0.1
        b = jax.random.normal(kb, bs, jnp.float32) * 0.1
        params.append((w, b))
    return params


def reference_forward(x, params):
    # Pure-JAX reference of the PyTorch forward (for sanity check).
    (w1, b1), (w2, b2), (w3, b3) = params
    h = jax.nn.softmax(x @ w1.T + b1, axis=-1)
    h = jax.nn.softmax(h @ w2.T + b2, axis=-1)
    return h @ w3.T + b3


if __name__ == "__main__":
    key = jax.random.PRNGKey(0)
    kx, kp = jax.random.split(key)

    B = 8  # small batch consistent with the module (features = 5)
    x = jax.random.normal(kx, (B, 5), jnp.float32)
    params = init_params(kp)

    out = mlp_forward(x, params)
    jax.block_until_ready(out)

    ref = reference_forward(x, params)
    assert out.shape == (B, 1)
    assert jnp.allclose(out, ref, atol=1e-5, rtol=1e-5)

    print("KERNEL_OK")
</pallas_src>

<mosaic_0001>
module attributes {stable_mosaic.version = 11 : i64} {
  func.func @mlp_kernel(%arg0: i32, %arg1: memref<66xf32, #tpu.memory_space<smem>>, %arg2: memref<5x8x128xf32, #tpu.memory_space<vmem>>, %arg3: memref<8x128xf32, #tpu.memory_space<vmem>>) attributes {dimension_semantics = [#tpu.dimension_semantics<parallel>], iteration_bounds = array<i64: 1>, scalar_prefetch = 0 : i64, scratch_operands = 0 : i64, tpu.core_type = #tpu.core_type<tc>, window_params = [{transform_indices = @transform_0, window_bounds = array<i64: 66>}, {transform_indices = @transform_1, window_bounds = array<i64: 5, 8, 128>}, {transform_indices = @transform_2, window_bounds = array<i64: 8, 128>}]} {
    %c0 = arith.constant 0 : index
    %c0_0 = arith.constant 0 : index
    %c0_1 = arith.constant 0 : index
    %0 = vector.load %arg2[%c0, %c0_0, %c0_1] : memref<5x8x128xf32, #tpu.memory_space<vmem>>, vector<1x8x128xf32>
    %1 = vector.shape_cast %0 : vector<1x8x128xf32> to vector<8x128xf32>
    %c1 = arith.constant 1 : index
    %c0_2 = arith.constant 0 : index
    %c0_3 = arith.constant 0 : index
    %2 = vector.load %arg2[%c1, %c0_2, %c0_3] : memref<5x8x128xf32, #tpu.memory_space<vmem>>, vector<1x8x128xf32>
    %3 = vector.shape_cast %2 : vector<1x8x128xf32> to vector<8x128xf32>
    %c2 = arith.constant 2 : index
    %c0_4 = arith.constant 0 : index
    %c0_5 = arith.constant 0 : index
    %4 = vector.load %arg2[%c2, %c0_4, %c0_5] : memref<5x8x128xf32, #tpu.memory_space<vmem>>, vector<1x8x128xf32>
    %5 = vector.shape_cast %4 : vector<1x8x128xf32> to vector<8x128xf32>
    %c3 = arith.constant 3 : index
    %c0_6 = arith.constant 0 : index
    %c0_7 = arith.constant 0 : index
    %6 = vector.load %arg2[%c3, %c0_6, %c0_7] : memref<5x8x128xf32, #tpu.memory_space<vmem>>, vector<1x8x128xf32>
    %7 = vector.shape_cast %6 : vector<1x8x128xf32> to vector<8x128xf32>
    %c4 = arith.constant 4 : index
    %c0_8 = arith.constant 0 : index
    %c0_9 = arith.constant 0 : index
    %8 = vector.load %arg2[%c4, %c0_8, %c0_9] : memref<5x8x128xf32, #tpu.memory_space<vmem>>, vector<1x8x128xf32>
    %9 = vector.shape_cast %8 : vector<1x8x128xf32> to vector<8x128xf32>
    %c0_10 = arith.constant 0 : index
    %10 = memref.load %arg1[%c0_10] : memref<66xf32, #tpu.memory_space<smem>>
    %11 = vector.broadcast %10 : f32 to vector<8x128xf32>
    %12 = arith.mulf %1, %11 : vector<8x128xf32>
    %c1_11 = arith.constant 1 : index
    %13 = memref.load %arg1[%c1_11] : memref<66xf32, #tpu.memory_space<smem>>
    %14 = vector.broadcast %13 : f32 to vector<8x128xf32>
    %15 = arith.mulf %3, %14 : vector<8x128xf32>
    %16 = arith.addf %12, %15 : vector<8x128xf32>
    %c2_12 = arith.constant 2 : index
    %17 = memref.load %arg1[%c2_12] : memref<66xf32, #tpu.memory_space<smem>>
    %18 = vector.broadcast %17 : f32 to vector<8x128xf32>
    %19 = arith.mulf %5, %18 : vector<8x128xf32>
    %20 = arith.addf %16, %19 : vector<8x128xf32>
    %c3_13 = arith.constant 3 : index
    %21 = memref.load %arg1[%c3_13] : memref<66xf32, #tpu.memory_space<smem>>
    %22 = vector.broadcast %21 : f32 to vector<8x128xf32>
    %23 = arith.mulf %7, %22 : vector<8x128xf32>
    %24 = arith.addf %20, %23 : vector<8x128xf32>
    %c4_14 = arith.constant 4 : index
    %25 = memref.load %arg1[%c4_14] : memref<66xf32, #tpu.memory_space<smem>>
    %26 = vector.broadcast %25 : f32 to vector<8x128xf32>
    %27 = arith.mulf %9, %26 : vector<8x128xf32>
    %28 = arith.addf %24, %27 : vector<8x128xf32>
    %c25 = arith.constant 25 : index
    %29 = memref.load %arg1[%c25] : memref<66xf32, #tpu.memory_space<smem>>
    %30 = vector.broadcast %29 : f32 to vector<8x128xf32>
    %31 = arith.addf %28, %30 : vector<8x128xf32>
    %c5 = arith.constant 5 : index
    %32 = memref.load %arg1[%c5] : memref<66xf32, #tpu.memory_space<smem>>
    %33 = vector.broadcast %32 : f32 to vector<8x128xf32>
    %34 = arith.mulf %1, %33 : vector<8x128xf32>
    %c6 = arith.constant 6 : index
    %35 = memref.load %arg1[%c6] : memref<66xf32, #tpu.memory_space<smem>>
    %36 = vector.broadcast %35 : f32 to vector<8x128xf32>
    %37 = arith.mulf %3, %36 : vector<8x128xf32>
    %38 = arith.addf %34, %37 : vector<8x128xf32>
    %c7 = arith.constant 7 : index
    %39 = memref.load %arg1[%c7] : memref<66xf32, #tpu.memory_space<smem>>
    %40 = vector.broadcast %39 : f32 to vector<8x128xf32>
    %41 = arith.mulf %5, %40 : vector<8x128xf32>
    %42 = arith.addf %38, %41 : vector<8x128xf32>
    %c8 = arith.constant 8 : index
    %43 = memref.load %arg1[%c8] : memref<66xf32, #tpu.memory_space<smem>>
    %44 = vector.broadcast %43 : f32 to vector<8x128xf32>
    %45 = arith.mulf %7, %44 : vector<8x128xf32>
    %46 = arith.addf %42, %45 : vector<8x128xf32>
    %c9 = arith.constant 9 : index
    %47 = memref.load %arg1[%c9] : memref<66xf32, #tpu.memory_space<smem>>
    %48 = vector.broadcast %47 : f32 to vector<8x128xf32>
    %49 = arith.mulf %9, %48 : vector<8x128xf32>
    %50 = arith.addf %46, %49 : vector<8x128xf32>
    %c26 = arith.constant 26 : index
    %51 = memref.load %arg1[%c26] : memref<66xf32, #tpu.memory_space<smem>>
    %52 = vector.broadcast %51 : f32 to vector<8x128xf32>
    %53 = arith.addf %50, %52 : vector<8x128xf32>
    %c10 = arith.constant 10 : index
    %54 = memref.load %arg1[%c10] : memref<66xf32, #tpu.memory_space<smem>>
    %55 = vector.broadcast %54 : f32 to vector<8x128xf32>
    %56 = arith.mulf %1, %55 : vector<8x128xf32>
    %c11 = arith.constant 11 : index
    %57 = memref.load %arg1[%c11] : memref<66xf32, #tpu.memory_space<smem>>
    %58 = vector.broadcast %57 : f32 to vector<8x128xf32>
    %59 = arith.mulf %3, %58 : vector<8x128xf32>
    %60 = arith.addf %56, %59 : vector<8x128xf32>
    %c12 = arith.constant 12 : index
    %61 = memref.load %arg1[%c12] : memref<66xf32, #tpu.memory_space<smem>>
    %62 = vector.broadcast %61 : f32 to vector<8x128xf32>
    %63 = arith.mulf %5, %62 : vector<8x128xf32>
    %64 = arith.addf %60, %63 : vector<8x128xf32>
    %c13 = arith.constant 13 : index
    %65 = memref.load %arg1[%c13] : memref<66xf32, #tpu.memory_space<smem>>
    %66 = vector.broadcast %65 : f32 to vector<8x128xf32>
    %67 = arith.mulf %7, %66 : vector<8x128xf32>
    %68 = arith.addf %64, %67 : vector<8x128xf32>
    %c14 = arith.constant 14 : index
    %69 = memref.load %arg1[%c14] : memref<66xf32, #tpu.memory_space<smem>>
    %70 = vector.broadcast %69 : f32 to vector<8x128xf32>
    %71 = arith.mulf %9, %70 : vector<8x128xf32>
    %72 = arith.addf %68, %71 : vector<8x128xf32>
    %c27 = arith.constant 27 : index
    %73 = memref.load %arg1[%c27] : memref<66xf32, #tpu.memory_space<smem>>
    %74 = vector.broadcast %73 : f32 to vector<8x128xf32>
    %75 = arith.addf %72, %74 : vector<8x128xf32>
    %c15 = arith.constant 15 : index
    %76 = memref.load %arg1[%c15] : memref<66xf32, #tpu.memory_space<smem>>
    %77 = vector.broadcast %76 : f32 to vector<8x128xf32>
    %78 = arith.mulf %1, %77 : vector<8x128xf32>
    %c16 = arith.constant 16 : index
    %79 = memref.load %arg1[%c16] : memref<66xf32, #tpu.memory_space<smem>>
    %80 = vector.broadcast %79 : f32 to vector<8x128xf32>
    %81 = arith.mulf %3, %80 : vector<8x128xf32>
    %82 = arith.addf %78, %81 : vector<8x128xf32>
    %c17 = arith.constant 17 : index
    %83 = memref.load %arg1[%c17] : memref<66xf32, #tpu.memory_space<smem>>
    %84 = vector.broadcast %83 : f32 to vector<8x128xf32>
    %85 = arith.mulf %5, %84 : vector<8x128xf32>
    %86 = arith.addf %82, %85 : vector<8x128xf32>
    %c18 = arith.constant 18 : index
    %87 = memref.load %arg1[%c18] : memref<66xf32, #tpu.memory_space<smem>>
    %88 = vector.broadcast %87 : f32 to vector<8x128xf32>
    %89 = arith.mulf %7, %88 : vector<8x128xf32>
    %90 = arith.addf %86, %89 : vector<8x128xf32>
    %c19 = arith.constant 19 : index
    %91 = memref.load %arg1[%c19] : memref<66xf32, #tpu.memory_space<smem>>
    %92 = vector.broadcast %91 : f32 to vector<8x128xf32>
    %93 = arith.mulf %9, %92 : vector<8x128xf32>
    %94 = arith.addf %90, %93 : vector<8x128xf32>
    %c28 = arith.constant 28 : index
    %95 = memref.load %arg1[%c28] : memref<66xf32, #tpu.memory_space<smem>>
    %96 = vector.broadcast %95 : f32 to vector<8x128xf32>
    %97 = arith.addf %94, %96 : vector<8x128xf32>
    %c20 = arith.constant 20 : index
    %98 = memref.load %arg1[%c20] : memref<66xf32, #tpu.memory_space<smem>>
    %99 = vector.broadcast %98 : f32 to vector<8x128xf32>
    %100 = arith.mulf %1, %99 : vector<8x128xf32>
    %c21 = arith.constant 21 : index
    %101 = memref.load %arg1[%c21] : memref<66xf32, #tpu.memory_space<smem>>
    %102 = vector.broadcast %101 : f32 to vector<8x128xf32>
    %103 = arith.mulf %3, %102 : vector<8x128xf32>
    %104 = arith.addf %100, %103 : vector<8x128xf32>
    %c22 = arith.constant 22 : index
    %105 = memref.load %arg1[%c22] : memref<66xf32, #tpu.memory_space<smem>>
    %106 = vector.broadcast %105 : f32 to vector<8x128xf32>
    %107 = arith.mulf %5, %106 : vector<8x128xf32>
    %108 = arith.addf %104, %107 : vector<8x128xf32>
    %c23 = arith.constant 23 : index
    %109 = memref.load %arg1[%c23] : memref<66xf32, #tpu.memory_space<smem>>
    %110 = vector.broadcast %109 : f32 to vector<8x128xf32>
    %111 = arith.mulf %7, %110 : vector<8x128xf32>
    %112 = arith.addf %108, %111 : vector<8x128xf32>
    %c24 = arith.constant 24 : index
    %113 = memref.load %arg1[%c24] : memref<66xf32, #tpu.memory_space<smem>>
    %114 = vector.broadcast %113 : f32 to vector<8x128xf32>
    %115 = arith.mulf %9, %114 : vector<8x128xf32>
    %116 = arith.addf %112, %115 : vector<8x128xf32>
    %c29 = arith.constant 29 : index
    %117 = memref.load %arg1[%c29] : memref<66xf32, #tpu.memory_space<smem>>
    %118 = vector.broadcast %117 : f32 to vector<8x128xf32>
    %119 = arith.addf %116, %118 : vector<8x128xf32>
    %120 = arith.maximumf %31, %53 : vector<8x128xf32>
    %121 = arith.maximumf %120, %75 : vector<8x128xf32>
    %122 = arith.maximumf %121, %97 : vector<8x128xf32>
    %123 = arith.maximumf %122, %119 : vector<8x128xf32>
    %124 = arith.subf %31, %123 : vector<8x128xf32>
    %125 = math.exp %124 : vector<8x128xf32>
    %126 = arith.subf %53, %123 : vector<8x128xf32>
    %127 = math.exp %126 : vector<8x128xf32>
    %128 = arith.subf %75, %123 : vector<8x128xf32>
    %129 = math.exp %128 : vector<8x128xf32>
    %130 = arith.subf %97, %123 : vector<8x128xf32>
    %131 = math.exp %130 : vector<8x128xf32>
    %132 = arith.subf %119, %123 : vector<8x128xf32>
    %133 = math.exp %132 : vector<8x128xf32>
    %134 = arith.addf %125, %127 : vector<8x128xf32>
    %135 = arith.addf %134, %129 : vector<8x128xf32>
    %136 = arith.addf %135, %131 : vector<8x128xf32>
    %137 = arith.addf %136, %133 : vector<8x128xf32>
    %138 = tpu.reciprocal %137 {approx = true} : vector<8x128xf32> -> vector<8x128xf32>
    %139 = arith.mulf %137, %138 : vector<8x128xf32>
    %cst = arith.constant 2.000000e+00 : f32
    %140 = vector.broadcast %cst : f32 to vector<8x128xf32>
    %141 = arith.subf %140, %139 : vector<8x128xf32>
    %142 = arith.mulf %138, %141 : vector<8x128xf32>
    %143 = arith.mulf %125, %142 : vector<8x128xf32>
    %144 = arith.mulf %127, %142 : vector<8x128xf32>
    %145 = arith.mulf %129, %142 : vector<8x128xf32>
    %146 = arith.mulf %131, %142 : vector<8x128xf32>
    %147 = arith.mulf %133, %142 : vector<8x128xf32>
    %c30 = arith.constant 30 : index
    %148 = memref.load %arg1[%c30] : memref<66xf32, #tpu.memory_space<smem>>
    %149 = vector.broadcast %148 : f32 to vector<8x128xf32>
    %150 = arith.mulf %143, %149 : vector<8x128xf32>
    %c31 = arith.constant 31 : index
    %151 = memref.load %arg1[%c31] : memref<66xf32, #tpu.memory_space<smem>>
    %152 = vector.broadcast %151 : f32 to vector<8x128xf32>
    %153 = arith.mulf %144, %152 : vector<8x128xf32>
    %154 = arith.addf %150, %153 : vector<8x128xf32>
    %c32 = arith.constant 32 : index
    %155 = memref.load %arg1[%c32] : memref<66xf32, #tpu.memory_space<smem>>
    %156 = vector.broadcast %155 : f32 to vector<8x128xf32>
    %157 = arith.mulf %145, %156 : vector<8x128xf32>
    %158 = arith.addf %154, %157 : vector<8x128xf32>
    %c33 = arith.constant 33 : index
    %159 = memref.load %arg1[%c33] : memref<66xf32, #tpu.memory_space<smem>>
    %160 = vector.broadcast %159 : f32 to vector<8x128xf32>
    %161 = arith.mulf %146, %160 : vector<8x128xf32>
    %162 = arith.addf %158, %161 : vector<8x128xf32>
    %c34 = arith.constant 34 : index
    %163 = memref.load %arg1[%c34] : memref<66xf32, #tpu.memory_space<smem>>
    %164 = vector.broadcast %163 : f32 to vector<8x128xf32>
    %165 = arith.mulf %147, %164 : vector<8x128xf32>
    %166 = arith.addf %162, %165 : vector<8x128xf32>
    %c55 = arith.constant 55 : index
    %167 = memref.load %arg1[%c55] : memref<66xf32, #tpu.memory_space<smem>>
    %168 = vector.broadcast %167 : f32 to vector<8x128xf32>
    %169 = arith.addf %166, %168 : vector<8x128xf32>
    %c35 = arith.constant 35 : index
    %170 = memref.load %arg1[%c35] : memref<66xf32, #tpu.memory_space<smem>>
    %171 = vector.broadcast %170 : f32 to vector<8x128xf32>
    %172 = arith.mulf %143, %171 : vector<8x128xf32>
    %c36 = arith.constant 36 : index
    %173 = memref.load %arg1[%c36] : memref<66xf32, #tpu.memory_space<smem>>
    %174 = vector.broadcast %173 : f32 to vector<8x128xf32>
    %175 = arith.mulf %144, %174 : vector<8x128xf32>
    %176 = arith.addf %172, %175 : vector<8x128xf32>
    %c37 = arith.constant 37 : index
    %177 = memref.load %arg1[%c37] : memref<66xf32, #tpu.memory_space<smem>>
    %178 = vector.broadcast %177 : f32 to vector<8x128xf32>
    %179 = arith.mulf %145, %178 : vector<8x128xf32>
    %180 = arith.addf %176, %179 : vector<8x128xf32>
    %c38 = arith.constant 38 : index
    %181 = memref.load %arg1[%c38] : memref<66xf32, #tpu.memory_space<smem>>
    %182 = vector.broadcast %181 : f32 to vector<8x128xf32>
    %183 = arith.mulf %146, %182 : vector<8x128xf32>
    %184 = arith.addf %180, %183 : vector<8x128xf32>
    %c39 = arith.constant 39 : index
    %185 = memref.load %arg1[%c39] : memref<66xf32, #tpu.memory_space<smem>>
    %186 = vector.broadcast %185 : f32 to vector<8x128xf32>
    %187 = arith.mulf %147, %186 : vector<8x128xf32>
    %188 = arith.addf %184, %187 : vector<8x128xf32>
    %c56 = arith.constant 56 : index
    %189 = memref.load %arg1[%c56] : memref<66xf32, #tpu.memory_space<smem>>
    %190 = vector.broadcast %189 : f32 to vector<8x128xf32>
    %191 = arith.addf %188, %190 : vector<8x128xf32>
    %c40 = arith.constant 40 : index
    %192 = memref.load %arg1[%c40] : memref<66xf32, #tpu.memory_space<smem>>
    %193 = vector.broadcast %192 : f32 to vector<8x128xf32>
    %194 = arith.mulf %143, %193 : vector<8x128xf32>
    %c41 = arith.constant 41 : index
    %195 = memref.load %arg1[%c41] : memref<66xf32, #tpu.memory_space<smem>>
    %196 = vector.broadcast %195 : f32 to vector<8x128xf32>
    %197 = arith.mulf %144, %196 : vector<8x128xf32>
    %198 = arith.addf %194, %197 : vector<8x128xf32>
    %c42 = arith.constant 42 : index
    %199 = memref.load %arg1[%c42] : memref<66xf32, #tpu.memory_space<smem>>
    %200 = vector.broadcast %199 : f32 to vector<8x128xf32>
    %201 = arith.mulf %145, %200 : vector<8x128xf32>
    %202 = arith.addf %198, %201 : vector<8x128xf32>
    %c43 = arith.constant 43 : index
    %203 = memref.load %arg1[%c43] : memref<66xf32, #tpu.memory_space<smem>>
    %204 = vector.broadcast %203 : f32 to vector<8x128xf32>
    %205 = arith.mulf %146, %204 : vector<8x128xf32>
    %206 = arith.addf %202, %205 : vector<8x128xf32>
    %c44 = arith.constant 44 : index
    %207 = memref.load %arg1[%c44] : memref<66xf32, #tpu.memory_space<smem>>
    %208 = vector.broadcast %207 : f32 to vector<8x128xf32>
    %209 = arith.mulf %147, %208 : vector<8x128xf32>
    %210 = arith.addf %206, %209 : vector<8x128xf32>
    %c57 = arith.constant 57 : index
    %211 = memref.load %arg1[%c57] : memref<66xf32, #tpu.memory_space<smem>>
    %212 = vector.broadcast %211 : f32 to vector<8x128xf32>
    %213 = arith.addf %210, %212 : vector<8x128xf32>
    %c45 = arith.constant 45 : index
    %214 = memref.load %arg1[%c45] : memref<66xf32, #tpu.memory_space<smem>>
    %215 = vector.broadcast %214 : f32 to vector<8x128xf32>
    %216 = arith.mulf %143, %215 : vector<8x128xf32>
    %c46 = arith.constant 46 : index
    %217 = memref.load %arg1[%c46] : memref<66xf32, #tpu.memory_space<smem>>
    %218 = vector.broadcast %217 : f32 to vector<8x128xf32>
    %219 = arith.mulf %144, %218 : vector<8x128xf32>
    %220 = arith.addf %216, %219 : vector<8x128xf32>
    %c47 = arith.constant 47 : index
    %221 = memref.load %arg1[%c47] : memref<66xf32, #tpu.memory_space<smem>>
    %222 = vector.broadcast %221 : f32 to vector<8x128xf32>
    %223 = arith.mulf %145, %222 : vector<8x128xf32>
    %224 = arith.addf %220, %223 : vector<8x128xf32>
    %c48 = arith.constant 48 : index
    %225 = memref.load %arg1[%c48] : memref<66xf32, #tpu.memory_space<smem>>
    %226 = vector.broadcast %225 : f32 to vector<8x128xf32>
    %227 = arith.mulf %146, %226 : vector<8x128xf32>
    %228 = arith.addf %224, %227 : vector<8x128xf32>
    %c49 = arith.constant 49 : index
    %229 = memref.load %arg1[%c49] : memref<66xf32, #tpu.memory_space<smem>>
    %230 = vector.broadcast %229 : f32 to vector<8x128xf32>
    %231 = arith.mulf %147, %230 : vector<8x128xf32>
    %232 = arith.addf %228, %231 : vector<8x128xf32>
    %c58 = arith.constant 58 : index
    %233 = memref.load %arg1[%c58] : memref<66xf32, #tpu.memory_space<smem>>
    %234 = vector.broadcast %233 : f32 to vector<8x128xf32>
    %235 = arith.addf %232, %234 : vector<8x128xf32>
    %c50 = arith.constant 50 : index
    %236 = memref.load %arg1[%c50] : memref<66xf32, #tpu.memory_space<smem>>
    %237 = vector.broadcast %236 : f32 to vector<8x128xf32>
    %238 = arith.mulf %143, %237 : vector<8x128xf32>
    %c51 = arith.constant 51 : index
    %239 = memref.load %arg1[%c51] : memref<66xf32, #tpu.memory_space<smem>>
    %240 = vector.broadcast %239 : f32 to vector<8x128xf32>
    %241 = arith.mulf %144, %240 : vector<8x128xf32>
    %242 = arith.addf %238, %241 : vector<8x128xf32>
    %c52 = arith.constant 52 : index
    %243 = memref.load %arg1[%c52] : memref<66xf32, #tpu.memory_space<smem>>
    %244 = vector.broadcast %243 : f32 to vector<8x128xf32>
    %245 = arith.mulf %145, %244 : vector<8x128xf32>
    %246 = arith.addf %242, %245 : vector<8x128xf32>
    %c53 = arith.constant 53 : index
    %247 = memref.load %arg1[%c53] : memref<66xf32, #tpu.memory_space<smem>>
    %248 = vector.broadcast %247 : f32 to vector<8x128xf32>
    %249 = arith.mulf %146, %248 : vector<8x128xf32>
    %250 = arith.addf %246, %249 : vector<8x128xf32>
    %c54 = arith.constant 54 : index
    %251 = memref.load %arg1[%c54] : memref<66xf32, #tpu.memory_space<smem>>
    %252 = vector.broadcast %251 : f32 to vector<8x128xf32>
    %253 = arith.mulf %147, %252 : vector<8x128xf32>
    %254 = arith.addf %250, %253 : vector<8x128xf32>
    %c59 = arith.constant 59 : index
    %255 = memref.load %arg1[%c59] : memref<66xf32, #tpu.memory_space<smem>>
    %256 = vector.broadcast %255 : f32 to vector<8x128xf32>
    %257 = arith.addf %254, %256 : vector<8x128xf32>
    %258 = arith.maximumf %169, %191 : vector<8x128xf32>
    %259 = arith.maximumf %258, %213 : vector<8x128xf32>
    %260 = arith.maximumf %259, %235 : vector<8x128xf32>
    %261 = arith.maximumf %260, %257 : vector<8x128xf32>
    %262 = arith.subf %169, %261 : vector<8x128xf32>
    %263 = math.exp %262 : vector<8x128xf32>
    %264 = arith.subf %191, %261 : vector<8x128xf32>
    %265 = math.exp %264 : vector<8x128xf32>
    %266 = arith.subf %213, %261 : vector<8x128xf32>
    %267 = math.exp %266 : vector<8x128xf32>
    %268 = arith.subf %235, %261 : vector<8x128xf32>
    %269 = math.exp %268 : vector<8x128xf32>
    %270 = arith.subf %257, %261 : vector<8x128xf32>
    %271 = math.exp %270 : vector<8x128xf32>
    %272 = arith.addf %263, %265 : vector<8x128xf32>
    %273 = arith.addf %272, %267 : vector<8x128xf32>
    %274 = arith.addf %273, %269 : vector<8x128xf32>
    %275 = arith.addf %274, %271 : vector<8x128xf32>
    %276 = tpu.reciprocal %275 {approx = true} : vector<8x128xf32> -> vector<8x128xf32>
    %277 = arith.mulf %275, %276 : vector<8x128xf32>
    %cst_15 = arith.constant 2.000000e+00 : f32
    %278 = vector.broadcast %cst_15 : f32 to vector<8x128xf32>
    %279 = arith.subf %278, %277 : vector<8x128xf32>
    %280 = arith.mulf %276, %279 : vector<8x128xf32>
    %c60 = arith.constant 60 : index
    %281 = memref.load %arg1[%c60] : memref<66xf32, #tpu.memory_space<smem>>
    %282 = vector.broadcast %281 : f32 to vector<8x128xf32>
    %283 = arith.mulf %263, %282 : vector<8x128xf32>
    %c61 = arith.constant 61 : index
    %284 = memref.load %arg1[%c61] : memref<66xf32, #tpu.memory_space<smem>>
    %285 = vector.broadcast %284 : f32 to vector<8x128xf32>
    %286 = arith.mulf %265, %285 : vector<8x128xf32>
    %287 = arith.addf %283, %286 : vector<8x128xf32>
    %c62 = arith.constant 62 : index
    %288 = memref.load %arg1[%c62] : memref<66xf32, #tpu.memory_space<smem>>
    %289 = vector.broadcast %288 : f32 to vector<8x128xf32>
    %290 = arith.mulf %267, %289 : vector<8x128xf32>
    %291 = arith.addf %287, %290 : vector<8x128xf32>
    %c63 = arith.constant 63 : index
    %292 = memref.load %arg1[%c63] : memref<66xf32, #tpu.memory_space<smem>>
    %293 = vector.broadcast %292 : f32 to vector<8x128xf32>
    %294 = arith.mulf %269, %293 : vector<8x128xf32>
    %295 = arith.addf %291, %294 : vector<8x128xf32>
    %c64 = arith.constant 64 : index
    %296 = memref.load %arg1[%c64] : memref<66xf32, #tpu.memory_space<smem>>
    %297 = vector.broadcast %296 : f32 to vector<8x128xf32>
    %298 = arith.mulf %271, %297 : vector<8x128xf32>
    %299 = arith.addf %295, %298 : vector<8x128xf32>
    %300 = arith.mulf %299, %280 : vector<8x128xf32>
    %c65 = arith.constant 65 : index
    %301 = memref.load %arg1[%c65] : memref<66xf32, #tpu.memory_space<smem>>
    %302 = vector.broadcast %301 : f32 to vector<8x128xf32>
    %303 = arith.addf %300, %302 : vector<8x128xf32>
    %c0_16 = arith.constant 0 : index
    %c0_17 = arith.constant 0 : index
    %304 = vector.load %arg3[%c0_16, %c0_17] : memref<8x128xf32, #tpu.memory_space<vmem>>, vector<8x128xf32>
    tpu.vector_store %arg3[%c0_16, %c0_17], %303 {strides = array<i32>} : memref<8x128xf32, #tpu.memory_space<vmem>>, vector<8x128xf32>,
    return
  }
  func.func @transform_0(%arg0: i32) -> i32 {
    %c0_i32 = arith.constant 0 : i32
    %c0_i32_0 = arith.constant 0 : i32
    return %c0_i32 : i32
  }
  func.func @transform_1(%arg0: i32) -> (i32, i32, i32) {
    %c0_i32 = arith.constant 0 : i32
    %c0_i32_0 = arith.constant 0 : i32
    %c0_i32_1 = arith.constant 0 : i32
    return %c0_i32, %arg0, %c0_i32_0 : i32, i32, i32
  }
  func.func @transform_2(%arg0: i32) -> (i32, i32) {
    %c0_i32 = arith.constant 0 : i32
    %c0_i32_0 = arith.constant 0 : i32
    return %arg0, %c0_i32 : i32, i32
  }
}

</mosaic_0001>

<llo_original>
// kernel: tpu_custom_call.1
$region0: #{tpu_custom_call.1}
  #allocation0 [shape = 'u32[]', space=smem, size = 0x4, offset = 0x4, fixed_abs, tag = 'smem constant byte address 0x4 - core index']
  #allocation1 [shape = 'u32[144,128]{1,0:T(1,128)}', space=vmem, size = 0x12000, scoped, tag = 'internal scratch']
  %s0 = inlined_call_operand.hbm [shape: f32[66], index: 0, kind: input, shape index: {}]
  %s1 = inlined_call_operand.hbm [shape: f32[5,8,128], index: 1, kind: input, shape index: {}]
  %s2 = inlined_call_operand.hbm [shape: f32[8,128], index: 2, kind: output, shape index: {}]
  %s3 = sld [smem:[#allocation0]]
  $region26: #{tpu_custom_call.1} parent=0
    _
  %s5 = ssub.s32 1, %s3
  %s6 = scalar_select 0, %s5, %s3
  $region1: #{tpu_custom_call.1} parent=0
    #allocation2 [shape = 'u8[512]{0}', space=smem, size = 0x200, scoped, tag = 'input window, operand 0, single buffered']
    #allocation3 [shape = 's32[1]{0}', space=sflag, size = 0x4, scoped, tag = 'scoped memory for tpu_custom_call.1']
    #allocation4 [shape = 's32[1]{0}', space=sflag, size = 0x4, scoped, tag = 'scoped memory for tpu_custom_call.1']
    #allocation5 [shape = 's32[1]{0}', space=sflag, size = 0x4, scoped, tag = 'scoped memory for tpu_custom_call.1']
    #allocation6 [shape = 'u8[20480]{0}', space=vmem, size = 0x5000, scoped, tag = 'input window, operand 1, single buffered']
    #allocation7 [shape = 'u8[4096]{0}', space=vmem, size = 0x1000, scoped, tag = 'output window, operand 0, single buffered']
    %7 = vsyncpa [#allocation5], 0
    %8 = vsyncpa [#allocation3], 0
    %9 = vsyncpa [#allocation4], 0
    // Predicated region
    $region2: #{tpu_custom_call.1} parent=1 // pred_check
      _
    $region3: #{tpu_custom_call.1} parent=1 // pred_check_branch
      %11 = sbr.rel (0) target = $region5
    $region4: #{tpu_custom_call.1} parent=1 // pred_region
      %s13 = ssub.s32 16, 16
      %14 = vsyncadd [#allocation5], %s13
      %17 = dma.hbm_to_smem %s0, 16, [#allocation2], [#allocation5]
    $region5: #{tpu_custom_call.1} parent=1 // pred_fallthru
      _
    // Predicated region
    $region6: #{tpu_custom_call.1} parent=1 // pred_check
      _
    $region7: #{tpu_custom_call.1} parent=1 // pred_check_branch
      %19 = sbr.rel (0) target = $region9
    $region8: #{tpu_custom_call.1} parent=1 // pred_region
      %s21 = ssub.s32 640, 640
      %22 = vsyncadd [#allocation3], %s21
      %s23 = sshll.u32 [#allocation6], 4
      %s24 = int_to_ptr.vmem [resolvable:$true] %s23
      %29 = dma.hbm_to_vmem [thread:$0]  %s1, 640, %s24, [#allocation3], 128, 128, 8
    $region9: #{tpu_custom_call.1} parent=1 // pred_fallthru
      _
    // Predicated region
    $region10: #{tpu_custom_call.1} parent=1 // pred_check
      _
    $region11: #{tpu_custom_call.1} parent=1 // pred_check_branch
      %31 = sbr.rel (0) target = $region13
    $region12: #{tpu_custom_call.1} parent=1 // pred_region
      %32 = dma.done [#allocation5], 16
    $region13: #{tpu_custom_call.1} parent=1 // pred_fallthru
      _
    // Predicated region
    $region14: #{tpu_custom_call.1} parent=1 // pred_check
      _
    $region15: #{tpu_custom_call.1} parent=1 // pred_check_branch
      %34 = sbr.rel (0) target = $region17
    $region16: #{tpu_custom_call.1} parent=1 // pred_region
      %35 = dma.done [#allocation3], 640
    $region17: #{tpu_custom_call.1} parent=1 // pred_fallthru
      _
    %36 = sfence
    %v37 = vld [vmem:[#allocation6] sm:$0xff]
    %s38 = scalar_lea.vmem [#allocation6], 8
    %v39 = vld [vmem:[%s38] sm:$0xff]
    %s40 = scalar_lea.vmem [#allocation6], 16
    %v41 = vld [vmem:[%s40] sm:$0xff]
    %s42 = scalar_lea.vmem [#allocation6], 24
    %v43 = vld [vmem:[%s42] sm:$0xff]
    %s44 = scalar_lea.vmem [#allocation6], 32
    %v45 = vld [vmem:[%s44] sm:$0xff]
    %s46 = sld [smem:[#allocation2]]
    %v47 = vstv %s46
    %v48 = vmul.f32 %v37, %v47
    %s49 = sld [smem:[#allocation2 + $0x1]]
    %v50 = vstv %s49
    %v51 = vmul.f32 %v39, %v50
    %v52 = vadd.f32 %v48, %v51
    %s53 = sld [smem:[#allocation2 + $0x2]]
    %v54 = vstv %s53
    %v55 = vmul.f32 %v41, %v54
    %v56 = vadd.f32 %v52, %v55
    %s57 = sld [smem:[#allocation2 + $0x3]]
    %v58 = vstv %s57
    %v59 = vmul.f32 %v43, %v58
    %v60 = vadd.f32 %v56, %v59
    %s61 = sld [smem:[#allocation2 + $0x4]]
    %v62 = vstv %s61
    %v63 = vmul.f32 %v45, %v62
    %v64 = vadd.f32 %v60, %v63
    %s65 = sld [smem:[#allocation2 + $0x19]]
    %v66 = vstv %s65
    %v67 = vadd.f32 %v64, %v66
    %s68 = sld [smem:[#allocation2 + $0x5]]
    %v69 = vstv %s68
    %v70 = vmul.f32 %v37, %v69
    %s71 = sld [smem:[#allocation2 + $0x6]]
    %v72 = vstv %s71
    %v73 = vmul.f32 %v39, %v72
    %v74 = vadd.f32 %v70, %v73
    %s75 = sld [smem:[#allocation2 + $0x7]]
    %v76 = vstv %s75
    %v77 = vmul.f32 %v41, %v76
    %v78 = vadd.f32 %v74, %v77
    %s79 = sld [smem:[#allocation2 + $0x8]]
    %v80 = vstv %s79
    %v81 = vmul.f32 %v43, %v80
    %v82 = vadd.f32 %v78, %v81
    %s83 = sld [smem:[#allocation2 + $0x9]]
    %v84 = vstv %s83
    %v85 = vmul.f32 %v45, %v84
    %v86 = vadd.f32 %v82, %v85
    %s87 = sld [smem:[#allocation2 + $0x1a]]
    %v88 = vstv %s87
    %v89 = vadd.f32 %v86, %v88
    %s90 = sld [smem:[#allocation2 + $0xa]]
    %v91 = vstv %s90
    %v92 = vmul.f32 %v37, %v91
    %s93 = sld [smem:[#allocation2 + $0xb]]
    %v94 = vstv %s93
    %v95 = vmul.f32 %v39, %v94
    %v96 = vadd.f32 %v92, %v95
    %s97 = sld [smem:[#allocation2 + $0xc]]
    %v98 = vstv %s97
    %v99 = vmul.f32 %v41, %v98
    %v100 = vadd.f32 %v96, %v99
    %s101 = sld [smem:[#allocation2 + $0xd]]
    %v102 = vstv %s101
    %v103 = vmul.f32 %v43, %v102
    %v104 = vadd.f32 %v100, %v103
    %s105 = sld [smem:[#allocation2 + $0xe]]
    %v106 = vstv %s105
    %v107 = vmul.f32 %v45, %v106
    %v108 = vadd.f32 %v104, %v107
    %s109 = sld [smem:[#allocation2 + $0x1b]]
    %v110 = vstv %s109
    %v111 = vadd.f32 %v108, %v110
    %s112 = sld [smem:[#allocation2 + $0xf]]
    %v113 = vstv %s112
    %v114 = vmul.f32 %v37, %v113
    %s115 = sld [smem:[#allocation2 + $0x10]]
    %v116 = vstv %s115
    %v117 = vmul.f32 %v39, %v116
    %v118 = vadd.f32 %v114, %v117
    %s119 = sld [smem:[#allocation2 + $0x11]]
    %v120 = vstv %s119
    %v121 = vmul.f32 %v41, %v120
    %v122 = vadd.f32 %v118, %v121
    %s123 = sld [smem:[#allocation2 + $0x12]]
    %v124 = vstv %s123
    %v125 = vmul.f32 %v43, %v124
    %v126 = vadd.f32 %v122, %v125
    %s127 = sld [smem:[#allocation2 + $0x13]]
    %v128 = vstv %s127
    %v129 = vmul.f32 %v45, %v128
    %v130 = vadd.f32 %v126, %v129
    %s131 = sld [smem:[#allocation2 + $0x1c]]
    %v132 = vstv %s131
    %v133 = vadd.f32 %v130, %v132
    %s134 = sld [smem:[#allocation2 + $0x14]]
    %v135 = vstv %s134
    %v136 = vmul.f32 %v37, %v135
    %s137 = sld [smem:[#allocation2 + $0x15]]
    %v138 = vstv %s137
    %v139 = vmul.f32 %v39, %v138
    %v140 = vadd.f32 %v136, %v139
    %s141 = sld [smem:[#allocation2 + $0x16]]
    %v142 = vstv %s141
    %v143 = vmul.f32 %v41, %v142
    %v144 = vadd.f32 %v140, %v143
    %s145 = sld [smem:[#allocation2 + $0x17]]
    %v146 = vstv %s145
    %v147 = vmul.f32 %v43, %v146
    %v148 = vadd.f32 %v144, %v147
    %s149 = sld [smem:[#allocation2 + $0x18]]
    %v150 = vstv %s149
    %v151 = vmul.f32 %v45, %v150
    %v152 = vadd.f32 %v148, %v151
    %s153 = sld [smem:[#allocation2 + $0x1d]]
    %v154 = vstv %s153
    %v155 = vadd.f32 %v152, %v154
    %v156 = vmax.f32 %v67, %v89
    %v157 = vmax.f32 %v156, %v111
    %v158 = vmax.f32 %v157, %v133
    %v159 = vmax.f32 %v158, %v155
    %v160 = vsub.f32 %v67, %v159
    %v161 = vmul.f32 %v160, 1.442695
    %v162 = vpow.pop %v161
    %v163 = vsub.f32 %v89, %v159
    %v164 = vmul.f32 %v163, 1.442695
    %v165 = vpow.pop %v164
    %v166 = vsub.f32 %v111, %v159
    %v167 = vmul.f32 %v166, 1.442695
    %v168 = vpow.pop %v167
    %v169 = vsub.f32 %v133, %v159
    %v170 = vmul.f32 %v169, 1.442695
    %v171 = vpow.pop %v170
    %v172 = vsub.f32 %v155, %v159
    %v173 = vmul.f32 %v172, 1.442695
    %v174 = vpow.pop %v173
    %v175 = vadd.f32 %v162, %v165
    %v176 = vadd.f32 %v175, %v168
    %v177 = vadd.f32 %v176, %v171
    %v178 = vadd.f32 %v177, %v174
    %v179 = vrcp.pop %v178
    %v180 = vmul.f32 %v178, %v179
    %v181 = vsub.f32 2.0, %v180
    %v182 = vmul.f32 %v179, %v181
    %v183 = vmul.f32 %v162, %v182
    %v184 = vmul.f32 %v165, %v182
    %v185 = vmul.f32 %v168, %v182
    %v186 = vmul.f32 %v171, %v182
    %v187 = vmul.f32 %v174, %v182
    %s188 = sld [smem:[#allocation2 + $0x1e]]
    %v189 = vstv %s188
    %v190 = vmul.f32 %v183, %v189
    %s191 = sld [smem:[#allocation2 + $0x1f]]
    %v192 = vstv %s191
    %v193 = vmul.f32 %v184, %v192
    %v194 = vadd.f32 %v190, %v193
    %s195 = sld [smem:[#allocation2 + $0x20]]
    %v196 = vstv %s195
    %v197 = vmul.f32 %v185, %v196
    %v198 = vadd.f32 %v194, %v197
    %s199 = sld [smem:[#allocation2 + $0x21]]
    %v200 = vstv %s199
    %v201 = vmul.f32 %v186, %v200
    %v202 = vadd.f32 %v198, %v201
    %s203 = sld [smem:[#allocation2 + $0x22]]
    %v204 = vstv %s203
    %v205 = vmul.f32 %v187, %v204
    %v206 = vadd.f32 %v202, %v205
    %s207 = sld [smem:[#allocation2 + $0x37]]
    %v208 = vstv %s207
    %v209 = vadd.f32 %v206, %v208
    %s210 = sld [smem:[#allocation2 + $0x23]]
    %v211 = vstv %s210
    %v212 = vmul.f32 %v183, %v211
    %s213 = sld [smem:[#allocation2 + $0x24]]
    %v214 = vstv %s213
    %v215 = vmul.f32 %v184, %v214
    %v216 = vadd.f32 %v212, %v215
    %s217 = sld [smem:[#allocation2 + $0x25]]
    %v218 = vstv %s217
    %v219 = vmul.f32 %v185, %v218
    %v220 = vadd.f32 %v216, %v219
    %s221 = sld [smem:[#allocation2 + $0x26]]
    %v222 = vstv %s221
    %v223 = vmul.f32 %v186, %v222
    %v224 = vadd.f32 %v220, %v223
    %s225 = sld [smem:[#allocation2 + $0x27]]
    %v226 = vstv %s225
    %v227 = vmul.f32 %v187, %v226
    %v228 = vadd.f32 %v224, %v227
    %s229 = sld [smem:[#allocation2 + $0x38]]
    %v230 = vstv %s229
    %v231 = vadd.f32 %v228, %v230
    %s232 = sld [smem:[#allocation2 + $0x28]]
    %v233 = vstv %s232
    %v234 = vmul.f32 %v183, %v233
    %s235 = sld [smem:[#allocation2 + $0x29]]
    %v236 = vstv %s235
    %v237 = vmul.f32 %v184, %v236
    %v238 = vadd.f32 %v234, %v237
    %s239 = sld [smem:[#allocation2 + $0x2a]]
    %v240 = vstv %s239
    %v241 = vmul.f32 %v185, %v240
    %v242 = vadd.f32 %v238, %v241
    %s243 = sld [smem:[#allocation2 + $0x2b]]
    %v244 = vstv %s243
    %v245 = vmul.f32 %v186, %v244
    %v246 = vadd.f32 %v242, %v245
    %s247 = sld [smem:[#allocation2 + $0x2c]]
    %v248 = vstv %s247
    %v249 = vmul.f32 %v187, %v248
    %v250 = vadd.f32 %v246, %v249
    %s251 = sld [smem:[#allocation2 + $0x39]]
    %v252 = vstv %s251
    %v253 = vadd.f32 %v250, %v252
    %s254 = sld [smem:[#allocation2 + $0x2d]]
    %v255 = vstv %s254
    %v256 = vmul.f32 %v183, %v255
    %s257 = sld [smem:[#allocation2 + $0x2e]]
    %v258 = vstv %s257
    %v259 = vmul.f32 %v184, %v258
    %v260 = vadd.f32 %v256, %v259
    %s261 = sld [smem:[#allocation2 + $0x2f]]
    %v262 = vstv %s261
    %v263 = vmul.f32 %v185, %v262
    %v264 = vadd.f32 %v260, %v263
    %s265 = sld [smem:[#allocation2 + $0x30]]
    %v266 = vstv %s265
    %v267 = vmul.f32 %v186, %v266
    %v268 = vadd.f32 %v264, %v267
    %s269 = sld [smem:[#allocation2 + $0x31]]
    %v270 = vstv %s269
    %v271 = vmul.f32 %v187, %v270
    %v272 = vadd.f32 %v268, %v271
    %s273 = sld [smem:[#allocation2 + $0x3a]]
    %v274 = vstv %s273
    %v275 = vadd.f32 %v272, %v274
    %s276 = sld [smem:[#allocation2 + $0x32]]
    %v277 = vstv %s276
    %v278 = vmul.f32 %v183, %v277
    %s279 = sld [smem:[#allocation2 + $0x33]]
    %v280 = vstv %s279
    %v281 = vmul.f32 %v184, %v280
    %v282 = vadd.f32 %v278, %v281
    %s283 = sld [smem:[#allocation2 + $0x34]]
    %v284 = vstv %s283
    %v285 = vmul.f32 %v185, %v284
    %v286 = vadd.f32 %v282, %v285
    %s287 = sld [smem:[#allocation2 + $0x35]]
    %v288 = vstv %s287
    %v289 = vmul.f32 %v186, %v288
    %v290 = vadd.f32 %v286, %v289
    %s291 = sld [smem:[#allocation2 + $0x36]]
    %v292 = vstv %s291
    %v293 = vmul.f32 %v187, %v292
    %v294 = vadd.f32 %v290, %v293
    %s295 = sld [smem:[#allocation2 + $0x3b]]
    %v296 = vstv %s295
    %v297 = vadd.f32 %v294, %v296
    %v298 = vmax.f32 %v209, %v231
    %v299 = vmax.f32 %v298, %v253
    %v300 = vmax.f32 %v299, %v275
    %v301 = vmax.f32 %v300, %v297
    %v302 = vsub.f32 %v209, %v301
    %v303 = vmul.f32 %v302, 1.442695
    %v304 = vpow.pop %v303
    %v305 = vsub.f32 %v231, %v301
    %v306 = vmul.f32 %v305, 1.442695
    %v307 = vpow.pop %v306
    %v308 = vsub.f32 %v253, %v301
    %v309 = vmul.f32 %v308, 1.442695
    %v310 = vpow.pop %v309
    %v311 = vsub.f32 %v275, %v301
    %v312 = vmul.f32 %v311, 1.442695
    %v313 = vpow.pop %v312
    %v314 = vsub.f32 %v297, %v301
    %v315 = vmul.f32 %v314, 1.442695
    %v316 = vpow.pop %v315
    %v317 = vadd.f32 %v304, %v307
    %v318 = vadd.f32 %v317, %v310
    %v319 = vadd.f32 %v318, %v313
    %v320 = vadd.f32 %v319, %v316
    %v321 = vrcp.pop %v320
    %v322 = vmul.f32 %v320, %v321
    %v323 = vsub.f32 2.0, %v322
    %v324 = vmul.f32 %v321, %v323
    %s325 = sld [smem:[#allocation2 + $0x3c]]
    %v326 = vstv %s325
    %v327 = vmul.f32 %v304, %v326
    %s328 = sld [smem:[#allocation2 + $0x3d]]
    %v329 = vstv %s328
    %v330 = vmul.f32 %v307, %v329
    %v331 = vadd.f32 %v327, %v330
    %s332 = sld [smem:[#allocation2 + $0x3e]]
    %v333 = vstv %s332
    %v334 = vmul.f32 %v310, %v333
    %v335 = vadd.f32 %v331, %v334
    %s336 = sld [smem:[#allocation2 + $0x3f]]
    %v337 = vstv %s336
    %v338 = vmul.f32 %v313, %v337
    %v339 = vadd.f32 %v335, %v338
    %s340 = sld [smem:[#allocation2 + $0x40]]
    %v341 = vstv %s340
    %v342 = vmul.f32 %v316, %v341
    %v343 = vadd.f32 %v339, %v342
    %v344 = vmul.f32 %v343, %v324
    %s345 = sld [smem:[#allocation2 + $0x41]]
    %v346 = vstv %s345
    %v347 = vadd.f32 %v344, %v346
    %348 = vst [vmem:[#allocation7] sm:$0xff] %v347
    // Predicated region
    $region18: #{tpu_custom_call.1} parent=1 // pred_check
      _
    $region19: #{tpu_custom_call.1} parent=1 // pred_check_branch
      %350 = sbr.rel (0) target = $region21
    $region20: #{tpu_custom_call.1} parent=1 // pred_region
      %s352 = ssub.s32 128, 128
      %353 = vsyncadd [#allocation4], %s352
      %s355 = sshll.u32 [#allocation7], 4
      %s356 = int_to_ptr.vmem [resolvable:$true] %s355
      %358 = dma.vmem_to_hbm [thread:$0]  %s356, 128, %s2, [#allocation4]
    $region21: #{tpu_custom_call.1} parent=1 // pred_fallthru
      _
    // Predicated region
    $region22: #{tpu_custom_call.1} parent=1 // pred_check
      _
    $region23: #{tpu_custom_call.1} parent=1 // pred_check_branch
      %360 = sbr.rel (0) target = $region25
    $region24: #{tpu_custom_call.1} parent=1 // pred_region
      %361 = dma.done [#allocation4], 128
    $region25: #{tpu_custom_call.1} parent=1 // pred_fallthru
      _
    %362 = vsyncpa [#allocation3], 1
    %363 = vsyncpa [#allocation4], 1
    %364 = vsyncpa [#allocation5], 1

</llo_original>
